<compile_context>
chip_gen: v7x
topology: tpu7x:2x2x1
jax: 0.10.0
libtpu: 0.0.40
codegen_flags: <defaults>
</compile_context>

<pallas_src>
import functools

import jax
import jax.numpy as jnp
from jax import lax
from jax.experimental import pallas as pl
from jax.experimental.pallas import tpu as pltpu


def _round_up(a, b):
    return ((a + b - 1) // b) * b


# --------------------------- adaLN modulation (tiny) --------------------------- #
def _adaln_kernel(emb_ref, w_ref, o_ref):
    e = emb_ref[...].astype(jnp.float32)
    s = e * jax.nn.sigmoid(e)                                  # SiLU
    o_ref[...] = jnp.dot(s.astype(w_ref.dtype), w_ref[...],
                         preferred_element_type=jnp.float32).astype(o_ref.dtype)


def adaln_modulation(emb, w_ada):
    """emb: (B, D); w_ada: (D, 2*D) -> SiLU(emb) @ w_ada, shape (B, 2*D)."""
    B, _ = emb.shape
    return pl.pallas_call(
        _adaln_kernel,
        out_shape=jax.ShapeDtypeStruct((B, w_ada.shape[1]), emb.dtype),
    )(emb, w_ada)


# ------------------ fused LayerNorm + modulate + final Linear ------------------ #
def _final_layer_kernel(x_ref, shift_ref, scale_ref, w_ref, o_ref, *, eps):
    # x_ref: (1, thw, D); shift/scale: (1, 1, D); w: (D, P_pad); o: (1, thw, P_pad)
    x = x_ref[0].astype(jnp.float32)                           # (thw, D)
    mean = jnp.mean(x, axis=-1, keepdims=True)
    xc = x - mean
    var = jnp.mean(xc * xc, axis=-1, keepdims=True)            # biased var (torch LayerNorm)
    xn = xc * lax.rsqrt(var + eps)                             # LayerNorm, no affine

    shift = shift_ref[0, 0].astype(jnp.float32)                # (D,)
    scale = scale_ref[0, 0].astype(jnp.float32)
    xm = xn * (1.0 + scale) + shift                            # modulate

    y = jnp.dot(xm.astype(w_ref.dtype), w_ref[...],
                preferred_element_type=jnp.float32)            # (thw, P_pad) on MXU
    o_ref[0] = y.astype(o_ref.dtype)


def final_layer(x, emb, w_ada, w_out, *, T, adaln_lora=None, thw=256, eps=1e-6):
    """
    x:      (B*T, HW, D)  tokens
    emb:    (B, D)        conditioning embedding
    w_ada:  (D, 2*D)      adaLN_modulation Linear weight, stored (in, out)
    w_out:  (D, P)        final Linear weight, stored (in, out); P = ps*ps*pt*out_ch
    adaln_lora: optional (B, >=2*D) tensor added to the adaLN output (use_adaln_lora path)
    """
    BT, HW, D = x.shape
    B, D_e = emb.shape
    assert D_e == D and BT == B * T, "shape mismatch between x, emb and T"
    P = w_out.shape[1]

    # --- shift / scale from adaLN (SiLU -> Linear, no bias) ---
    ss = adaln_modulation(emb, w_ada)                          # (B, 2D)
    if adaln_lora is not None:
        ss = ss + adaln_lora[:, : 2 * D].astype(ss.dtype)      # use_adaln_lora=True path
    shift = ss[:, :D].reshape(B, 1, D)
    scale = ss[:, D:].reshape(B, 1, D)

    # --- tile sizing / padding ---
    hw8 = _round_up(HW, 8)
    thw_eff = max(8, min(_round_up(thw, 8), hw8))              # sublane-aligned row tile
    hw_pad = _round_up(HW, thw_eff)
    p_pad = _round_up(P, 128)                                  # lane-dense output stores

    xp = x if hw_pad == HW else jnp.pad(x, ((0, 0), (0, hw_pad - HW), (0, 0)))
    wp = w_out if p_pad == P else jnp.pad(w_out, ((0, 0), (0, p_pad - P)))

    grid = (BT, hw_pad // thw_eff)

    # Double-buffered block footprint -> explicit scoped-VMEM limit (cap for v7x's 64 MiB).
    blk_bytes = 4 * (thw_eff * D + thw_eff * p_pad + D * p_pad + 2 * D)
    vmem_limit = int(min(max(2 * blk_bytes + (2 << 20), 32 << 20), 64 << 20))

    flops = 2 * BT * hw_pad * D * p_pad + 10 * BT * hw_pad * D
    bytes_accessed = 4 * (BT * hw_pad * (D + p_pad) + D * p_pad + 2 * B * D)

    out = pl.pallas_call(
        functools.partial(_final_layer_kernel, eps=eps),
        out_shape=jax.ShapeDtypeStruct((BT, hw_pad, p_pad), x.dtype),
        grid_spec=pltpu.PrefetchScalarGridSpec(
            num_scalar_prefetch=0,
            grid=grid,
            in_specs=[
                pl.BlockSpec((1, thw_eff, D), lambda bt, j: (bt, j, 0)),     # x tile
                pl.BlockSpec((1, 1, D), lambda bt, j: (bt // T, 0, 0)),      # shift[b]
                pl.BlockSpec((1, 1, D), lambda bt, j: (bt // T, 0, 0)),      # scale[b]
                pl.BlockSpec((D, p_pad), lambda bt, j: (0, 0)),              # W resident
            ],
            out_specs=pl.BlockSpec((1, thw_eff, p_pad), lambda bt, j: (bt, j, 0)),
        ),
        compiler_params=pltpu.CompilerParams(
            dimension_semantics=("parallel", "parallel"),
            vmem_limit_bytes=vmem_limit,
        ),
        cost_estimate=pl.CostEstimate(
            flops=flops,
            transcendentals=BT * hw_pad,
            bytes_accessed=bytes_accessed,
        ),
    )(xp, shift, scale, wp)

    return out[:, :HW, :P]


if __name__ == "__main__":
    # Small shapes consistent with the module:
    # hidden_size=128, spatial_patch=2, temporal_patch=1, out_channels=32 -> P = 128
    B, T, HW, D = 2, 2, 16, 128
    ps, pt, cout = 2, 1, 32
    P = ps * ps * pt * cout
    eps = 1e-6

    key = jax.random.PRNGKey(0)
    kx, ke, k1, k2 = jax.random.split(key, 4)
    x = jax.random.normal(kx, (B * T, HW, D), dtype=jnp.float32)
    emb = jax.random.normal(ke, (B, D), dtype=jnp.float32)
    # PyTorch stores Linear weights as (out, in); we keep the transposed (in, out) layout.
    w_ada = jax.random.normal(k1, (D, 2 * D), dtype=jnp.float32) * (1.0 / D ** 0.5)
    w_out = jax.random.normal(k2, (D, P), dtype=jnp.float32) * (1.0 / D ** 0.5)

    out = final_layer(x, emb, w_ada, w_out, T=T)
    out = jax.block_until_ready(out)

    # Pure-JAX reference of FinalLayer.forward (use_adaln_lora=False).
    ss = jax.nn.silu(emb) @ w_ada
    shift_b, scale_b = ss[:, :D], ss[:, D:]
    shift_bt = jnp.repeat(shift_b, T, axis=0)                  # 'b d -> (b t) d'
    scale_bt = jnp.repeat(scale_b, T, axis=0)
    mean = x.mean(-1, keepdims=True)
    var = x.var(-1, keepdims=True)
    xn = (x - mean) / jnp.sqrt(var + eps)
    xm = xn * (1.0 + scale_bt[:, None, :]) + shift_bt[:, None, :]
    ref = xm @ w_out

    assert out.shape == (B * T, HW, P)
    max_err = float(jnp.max(jnp.abs(out - ref)))
    assert jnp.allclose(out, ref, atol=1e-3, rtol=1e-3), max_err

    print("KERNEL_OK")
</pallas_src>

<mosaic_0001>
module attributes {stable_mosaic.version = 11 : i64} {
  func.func @_adaln_kernel(%arg0: memref<2x128xf32, #tpu.memory_space<vmem>>, %arg1: memref<128x256xf32, #tpu.memory_space<vmem>>, %arg2: memref<2x256xf32, #tpu.memory_space<vmem>>) attributes {dimension_semantics = [], scalar_prefetch = 0 : i64, scratch_operands = 0 : i64, tpu.core_type = #tpu.core_type<tc>} {
    %c0 = arith.constant 0 : index
    %c0_0 = arith.constant 0 : index
    %0 = vector.load %arg0[%c0, %c0_0] : memref<2x128xf32, #tpu.memory_space<vmem>>, vector<2x128xf32>
    %1 = arith.negf %0 : vector<2x128xf32>
    %2 = math.exp %1 : vector<2x128xf32>
    %cst = arith.constant 1.000000e+00 : f32
    %3 = vector.broadcast %cst : f32 to vector<2x128xf32>
    %4 = arith.addf %3, %2 : vector<2x128xf32>
    %5 = arith.divf %3, %4 : vector<2x128xf32>
    %6 = arith.mulf %0, %5 : vector<2x128xf32>
    %c0_1 = arith.constant 0 : index
    %c0_2 = arith.constant 0 : index
    %7 = vector.load %arg1[%c0_1, %c0_2] : memref<128x256xf32, #tpu.memory_space<vmem>>, vector<128x256xf32>
    %cst_3 = arith.constant dense<0.000000e+00> : vector<2x256xf32>
    %8 = tpu.matmul %6, %7, %cst_3 {dimension_numbers = #tpu.dot_dimension_numbers<[1], [0], [0], [1], [0, 0, 1, 1], [], []>} : vector<2x128xf32>, vector<128x256xf32>, vector<2x256xf32> -> vector<2x256xf32>
    %c0_4 = arith.constant 0 : index
    %c0_5 = arith.constant 0 : index
    %9 = vector.load %arg2[%c0_4, %c0_5] : memref<2x256xf32, #tpu.memory_space<vmem>>, vector<2x256xf32>
    tpu.vector_store %arg2[%c0_4, %c0_5], %8 {strides = array<i32>} : memref<2x256xf32, #tpu.memory_space<vmem>>, vector<2x256xf32>,
    return
  }
}

</mosaic_0001>

<llo_original>
// kernel: tpu_custom_call.1
$region0: #{tpu_custom_call.1}
  #allocation0 [shape = 'u32[]', space=smem, size = 0x4, offset = 0x4, fixed_abs, tag = 'smem constant byte address 0x4 - core index']
  #allocation1 [shape = 'u32[144,128]{1,0:T(1,128)}', space=vmem, size = 0x12000, scoped, tag = 'internal scratch']
  %s0 = inlined_call_operand.hbm [shape: f32[2,128], index: 0, kind: input, shape index: {}]
  %s1 = inlined_call_operand.hbm [shape: f32[128,256], index: 1, kind: input, shape index: {}]
  %s2 = inlined_call_operand.hbm [shape: f32[2,256], index: 2, kind: output, shape index: {}]
  %s3 = sld [smem:[#allocation0]]
  $region26: #{tpu_custom_call.1} parent=0
    _
  %s5 = ssub.s32 1, %s3
  %s6 = scalar_select 0, %s5, %s3
  $region1: #{tpu_custom_call.1} parent=0
    #allocation2 [shape = 'u8[1024]{0}', space=vmem, size = 0x400, scoped, tag = 'input window, operand 0, single buffered']
    #allocation3 [shape = 's32[1]{0}', space=sflag, size = 0x4, scoped, tag = 'scoped memory for tpu_custom_call.1']
    #allocation4 [shape = 's32[1]{0}', space=sflag, size = 0x4, scoped, tag = 'scoped memory for tpu_custom_call.1']
    #allocation5 [shape = 'u8[131072]{0}', space=vmem, size = 0x20000, scoped, tag = 'input window, operand 1, single buffered']
    #allocation6 [shape = 's32[1]{0}', space=sflag, size = 0x4, scoped, tag = 'scoped memory for tpu_custom_call.1']
    #allocation7 [shape = 'u8[2048]{0}', space=vmem, size = 0x800, scoped, tag = 'output window, operand 0, single buffered']
    %7 = vsyncpa [#allocation3], 0
    %8 = vsyncpa [#allocation6], 0
    %9 = vsyncpa [#allocation4], 0
    // Predicated region
    $region2: #{tpu_custom_call.1} parent=1 // pred_check
      _
    $region3: #{tpu_custom_call.1} parent=1 // pred_check_branch
      %11 = sbr.rel (0) target = $region5
    $region4: #{tpu_custom_call.1} parent=1 // pred_region
      %s13 = ssub.s32 32, 32
      %14 = vsyncadd [#allocation3], %s13
      %s16 = sshll.u32 [#allocation2], 4
      %s17 = int_to_ptr.vmem [resolvable:$true] %s16
      %19 = dma.hbm_to_vmem [thread:$0]  %s0, 32, %s17, [#allocation3]
    $region5: #{tpu_custom_call.1} parent=1 // pred_fallthru
      _
    // Predicated region
    $region6: #{tpu_custom_call.1} parent=1 // pred_check
      _
    $region7: #{tpu_custom_call.1} parent=1 // pred_check_branch
      %21 = sbr.rel (0) target = $region9
    $region8: #{tpu_custom_call.1} parent=1 // pred_region
      %s23 = ssub.s32 4096, 4096
      %24 = vsyncadd [#allocation6], %s23
      %s25 = sshll.u32 [#allocation5], 4
      %s26 = int_to_ptr.vmem [resolvable:$true] %s25
      %31 = dma.hbm_to_vmem [thread:$0]  %s1, 4096, %s26, [#allocation6], 256, 256, 16
    $region9: #{tpu_custom_call.1} parent=1 // pred_fallthru
      _
    // Predicated region
    $region10: #{tpu_custom_call.1} parent=1 // pred_check
      _
    $region11: #{tpu_custom_call.1} parent=1 // pred_check_branch
      %33 = sbr.rel (0) target = $region13
    $region12: #{tpu_custom_call.1} parent=1 // pred_region
      %34 = dma.done [#allocation3], 32
    $region13: #{tpu_custom_call.1} parent=1 // pred_fallthru
      _
    // Predicated region
    $region14: #{tpu_custom_call.1} parent=1 // pred_check
      _
    $region15: #{tpu_custom_call.1} parent=1 // pred_check_branch
      %36 = sbr.rel (0) target = $region17
    $region16: #{tpu_custom_call.1} parent=1 // pred_region
      %37 = dma.done [#allocation6], 4096
    $region17: #{tpu_custom_call.1} parent=1 // pred_fallthru
      _
    %v38 = vld [vmem:[#allocation2] sm:$0x3]
    %v39 = vxor.u32 %v38, 2147483648
    %v40 = vmul.f32 %v39, 1.442695
    %v41 = vpow.pop %v40
    %v42 = vadd.f32 %v41, 1.0
    %v43 = vrcp.pop %v42
    %v44 = vmul.f32 1.0, %v43
    %v45 = vmul.f32 %v38, %v44
    %v46 = vld [vmem:[#allocation5] sm:$0xff]
    %v47 = vld [vmem:[#allocation5 + $0x8] sm:$0xff]
    %v48 = vld [vmem:[#allocation5 + $0x10] sm:$0xff]
    %v49 = vld [vmem:[#allocation5 + $0x18] sm:$0xff]
    %v50 = vld [vmem:[#allocation5 + $0x20] sm:$0xff]
    %v51 = vld [vmem:[#allocation5 + $0x28] sm:$0xff]
    %v52 = vld [vmem:[#allocation5 + $0x30] sm:$0xff]
    %v53 = vld [vmem:[#allocation5 + $0x38] sm:$0xff]
    %v54 = vld [vmem:[#allocation5 + $0x40] sm:$0xff]
    %v55 = vld [vmem:[#allocation5 + $0x48] sm:$0xff]
    %v56 = vld [vmem:[#allocation5 + $0x50] sm:$0xff]
    %v57 = vld [vmem:[#allocation5 + $0x58] sm:$0xff]
    %v58 = vld [vmem:[#allocation5 + $0x60] sm:$0xff]
    %v59 = vld [vmem:[#allocation5 + $0x68] sm:$0xff]
    %v60 = vld [vmem:[#allocation5 + $0x70] sm:$0xff]
    %v61 = vld [vmem:[#allocation5 + $0x78] sm:$0xff]
    %v62 = vld [vmem:[#allocation5 + $0x80] sm:$0xff]
    %v63 = vld [vmem:[#allocation5 + $0x88] sm:$0xff]
    %v64 = vld [vmem:[#allocation5 + $0x90] sm:$0xff]
    %v65 = vld [vmem:[#allocation5 + $0x98] sm:$0xff]
    %v66 = vld [vmem:[#allocation5 + $0xa0] sm:$0xff]
    %v67 = vld [vmem:[#allocation5 + $0xa8] sm:$0xff]
    %v68 = vld [vmem:[#allocation5 + $0xb0] sm:$0xff]
    %v69 = vld [vmem:[#allocation5 + $0xb8] sm:$0xff]
    %v70 = vld [vmem:[#allocation5 + $0xc0] sm:$0xff]
    %v71 = vld [vmem:[#allocation5 + $0xc8] sm:$0xff]
    %v72 = vld [vmem:[#allocation5 + $0xd0] sm:$0xff]
    %v73 = vld [vmem:[#allocation5 + $0xd8] sm:$0xff]
    %v74 = vld [vmem:[#allocation5 + $0xe0] sm:$0xff]
    %v75 = vld [vmem:[#allocation5 + $0xe8] sm:$0xff]
    %v76 = vld [vmem:[#allocation5 + $0xf0] sm:$0xff]
    %v77 = vld [vmem:[#allocation5 + $0xf8] sm:$0xff]
    %78 = vmatprep.subr.mxu0 %v47
    %79 = vmatpush1.msra.mxu0 %v46
    %80 = vmatprep.subr.mxu0 %v49
    %81 = vmatpush1.msra.mxu0 %v48
    %82 = vmatprep.subr.mxu0 %v51
    %83 = vmatpush1.msra.mxu0 %v50
    %84 = vmatprep.subr.mxu0 %v53
    %85 = vmatpush1.msra.mxu0 %v52
    %86 = vmatprep.subr.mxu0 %v55
    %87 = vmatpush1.msra.mxu0 %v54
    %88 = vmatprep.subr.mxu0 %v57
    %89 = vmatpush1.msra.mxu0 %v56
    %90 = vmatprep.subr.mxu0 %v59
    %91 = vmatpush1.msra.mxu0 %v58
    %92 = vmatprep.subr.mxu0 %v61
    %93 = vmatpush1.msra.mxu0 %v60
    %94 = vmatprep.subr.mxu0 %v63
    %95 = vmatpush1.msra.mxu0 %v62
    %96 = vmatprep.subr.mxu0 %v65
    %97 = vmatpush1.msra.mxu0 %v64
    %98 = vmatprep.subr.mxu0 %v67
    %99 = vmatpush1.msra.mxu0 %v66
    %100 = vmatprep.subr.mxu0 %v69
    %101 = vmatpush1.msra.mxu0 %v68
    %102 = vmatprep.subr.mxu0 %v71
    %103 = vmatpush1.msra.mxu0 %v70
    %104 = vmatprep.subr.mxu0 %v73
    %105 = vmatpush1.msra.mxu0 %v72
    %106 = vmatprep.subr.mxu0 %v75
    %107 = vmatpush1.msra.mxu0 %v74
    %108 = vmatprep.subr.mxu0 %v77
    %109 = vmatpush1.msra.mxu0 %v76
    %110 = vmatprep.subr.mxu0 0.0
    %111 = vmatpush1.msra.mxu0 0.0
    %112 = vmatprep.subr.mxu0 0.0
    %113 = vmatpush1.msra.mxu0 0.0
    %114 = vmatprep.subr.mxu0 0.0
    %115 = vmatpush1.msra.mxu0 0.0
    %116 = vmatprep.subr.mxu0 0.0
    %117 = vmatpush1.msra.mxu0 0.0
    %118 = vmatprep.subr.mxu0 0.0
    %119 = vmatpush1.msra.mxu0 0.0
    %120 = vmatprep.subr.mxu0 0.0
    %121 = vmatpush1.msra.mxu0 0.0
    %122 = vmatprep.subr.mxu0 0.0
    %123 = vmatpush1.msra.mxu0 0.0
    %124 = vmatprep.subr.mxu0 0.0
    %125 = vmatpush1.msra.mxu0 0.0
    %126 = vmatprep.subr.mxu0 0.0
    %127 = vmatpush1.msra.mxu0 0.0
    %128 = vmatprep.subr.mxu0 0.0
    %129 = vmatpush1.msra.mxu0 0.0
    %130 = vmatprep.subr.mxu0 0.0
    %131 = vmatpush1.msra.mxu0 0.0
    %132 = vmatprep.subr.mxu0 0.0
    %133 = vmatpush1.msra.mxu0 0.0
    %134 = vmatprep.subr.mxu0 0.0
    %135 = vmatpush1.msra.mxu0 0.0
    %136 = vmatprep.subr.mxu0 0.0
    %137 = vmatpush1.msra.mxu0 0.0
    %138 = vmatprep.subr.mxu0 0.0
    %139 = vmatpush1.msra.mxu0 0.0
    %140 = vmatprep.subr.mxu0 0.0
    %141 = vmatpush1.msra.mxu0 0.0
    %142 = vmatprep.mubr.f32.mxu0 0.0
    %143 = vmatmul.mubr.f32.gmra.mrb[0].mxu0 %v45
    %v144 = vpop.f32.mrb[0].mxu0
    %v145 = vadd.f32 0.0, %v144
    %v146 = vpop.f32.mrb[0].mxu0
    %v147 = vadd.f32 0.0, %v146
    %148 = vdwg.mxu0
    %v151 = vcombine.low %v145, %v147
    %v153 = vunpack.c.l.s4 1983009808
    %v154 = vunpack.c.0.s8 %v153
    %v155 = vlaneseq
    %v156 = vshrl.u32 %v155, 7
    %v157 = vsub.s32 %v154, %v156
    %v158 = vrot.slane %v151, %v157
    %160 = vst [vmem:[#allocation7] sm:$0xf] %v158
    // Predicated region
    $region18: #{tpu_custom_call.1} parent=1 // pred_check
      _
    $region19: #{tpu_custom_call.1} parent=1 // pred_check_branch
      %162 = sbr.rel (0) target = $region21
    $region20: #{tpu_custom_call.1} parent=1 // pred_region
      %s164 = ssub.s32 64, 64
      %165 = vsyncadd [#allocation4], %s164
      %s167 = sshll.u32 [#allocation7], 4
      %s168 = int_to_ptr.vmem [resolvable:$true] %s167
      %170 = dma.vmem_to_hbm [thread:$0]  %s168, 64, %s2, [#allocation4]
    $region21: #{tpu_custom_call.1} parent=1 // pred_fallthru
      _
    // Predicated region
    $region22: #{tpu_custom_call.1} parent=1 // pred_check
      _
    $region23: #{tpu_custom_call.1} parent=1 // pred_check_branch
      %172 = sbr.rel (0) target = $region25
    $region24: #{tpu_custom_call.1} parent=1 // pred_region
      %173 = dma.done [#allocation4], 64
    $region25: #{tpu_custom_call.1} parent=1 // pred_fallthru
      _
    %174 = vsyncpa [#allocation3], 1
    %175 = vsyncpa [#allocation6], 1
    %176 = vsyncpa [#allocation4], 1

</llo_original>
